<compile_context>
chip_gen: v7x
topology: tpu7x:2x2x1
jax: 0.10.0
libtpu: 0.0.40
codegen_flags: <defaults>
</compile_context>

<pallas_src>
import jax
import jax.numpy as jnp
from jax.experimental import pallas as pl
from jax.experimental.pallas import tpu as pltpu


# ----------------------------------------------------------------------------
# Fused GATLayer kernel: one batch element per grid step.
#   x_ref    : (1, L, D)   token sequence
#   p_ref    : (1, R, D)   relation embeddings
#   mask_ref : (1, 2, L)   row 0 = keep (1/0), row 1 = additive (-1e9 on masked)
#   w_ref    : (2, D, D+4) packed weights  [wv | wks | wqs | wgp | wgo] per block
#   b_ref    : (2, D+2)    packed biases   [bv | score_bias | gate_bias] per block
#   x_out_ref: (1, L, D)   x_new = ra1(x, p) + x
#   p_out_ref: (1, R, D)   p_new = ra2(p, x_new, mask) + p
# ----------------------------------------------------------------------------
def gat_layer_kernel(x_ref, p_ref, mask_ref, w_ref, b_ref, x_out_ref, p_out_ref):
    D = x_ref.shape[-1]

    xv = x_ref[0]                     # (L, D)
    pv = p_ref[0]                     # (R, D)
    keep = mask_ref[0, 0:1, :]        # (1, L)  multiplicative keep
    negb = mask_ref[0, 1:2, :]        # (1, L)  additive -1e9 on masked keys

    def relation_attention(q_in, kv_in, w, brow, key_keep=None, key_neg=None):
        # w: (D, D+4), brow: (1, D+2)
        bv = brow[:, :D]              # (1, D)   value bias
        sb = brow[:, D:D + 1]         # (1, 1)   collapsed score bias
        bg = brow[:, D + 1:D + 2]     # (1, 1)   gate bias

        # kv side: one packed matmul gives value projection + key score part.
        kvw = jnp.dot(kv_in, w, preferred_element_type=jnp.float32)   # (Lk, D+4)
        v = kvw[:, :D] + bv                                            # (Lk, D)
        sk = kvw[:, D:D + 1]                                           # (Lk, 1)

        # query side: one packed matmul gives query score part + gate p-part.
        qw = jnp.dot(q_in, w, preferred_element_type=jnp.float32)      # (Lq, D+4)
        sq = qw[:, D + 1:D + 2]                                        # (Lq, 1)
        gp = qw[:, D + 2:D + 3]                                        # (Lq, 1)

        # score[l, r] = q_l@wqs + k_r@wks + sb   (== Linear(cat([q, k])))
        score = sq + sk.T + sb                                         # (Lq, Lk)
        if key_keep is not None:
            # exact masked_fill(mask == 0, -1e9): score*1+0 or score*0+(-1e9)
            score = score * key_keep + key_neg

        # softmax over keys (max-subtracted); reciprocal on the EUP.
        score = score - jnp.max(score, axis=-1, keepdims=True)
        e = jnp.exp(score)
        attn = e * pl.reciprocal(jnp.sum(e, axis=-1, keepdims=True), approx=True)

        out = jnp.dot(attn, v, preferred_element_type=jnp.float32) + q_in  # (Lq, D)

        # gate: sigmoid(out@wgo + q_in@wgp + bg)
        ow = jnp.dot(out, w, preferred_element_type=jnp.float32)       # (Lq, D+4)
        g = jax.nn.sigmoid(ow[:, D + 3:D + 4] + gp + bg)               # (Lq, 1)
        return g * out + (1.0 - g) * q_in

    # ra1: query = x, kv = p, no mask; GATLayer residual.
    x_new = relation_attention(xv, pv, w_ref[0], b_ref[0:1, :]) + xv

    # ra2: query = p, kv = updated x, mask over seq_len keys; residual.
    p_new = relation_attention(pv, x_new, w_ref[1], b_ref[1:2, :], keep, negb) + pv

    x_out_ref[0] = x_new.astype(x_out_ref.dtype)
    p_out_ref[0] = p_new.astype(p_out_ref.dtype)


# ----------------------------------------------------------------------------
# Wrapper: pack parameters (algebraic collapse of q/k) + single pallas_call.
# ----------------------------------------------------------------------------
def pack_ra_params(prm):
    """Collapse q/k projections into the score projection and pack weights."""
    wqs = prm["wq"] @ prm["wsq"]                                        # (D, 1)
    wks = prm["wk"] @ prm["wsk"]                                        # (D, 1)
    sb = prm["bq"] @ prm["wsq"] + prm["bk"] @ prm["wsk"] + prm["bs"]    # (1, 1)
    w = jnp.concatenate([prm["wv"], wks, wqs, prm["wgp"], prm["wgo"]], axis=1)  # (D, D+4)
    b = jnp.concatenate([prm["bv"], sb, prm["bg"]], axis=1)             # (1, D+2)
    return w, b


def pack_gat_params(prm1, prm2):
    w1, b1 = pack_ra_params(prm1)
    w2, b2 = pack_ra_params(prm2)
    return jnp.stack([w1, w2], axis=0), jnp.concatenate([b1, b2], axis=0)


def gat_layer(x, p, mask, packed):
    """x: (B, L, D), p: (B, R, D), mask: (B, L) with 1=keep / 0=masked."""
    B, L, D = x.shape
    _, R, _ = p.shape
    w_all, b_all = packed            # (2, D, D+4), (2, D+2)

    keep = mask.astype(jnp.float32)                  # (B, L)
    negb = (keep - 1.0) * 1e9                        # 0 where keep, -1e9 where masked
    mask_kn = jnp.stack([keep, negb], axis=1)        # (B, 2, L)

    full3 = lambda b: (0, 0, 0)
    full2 = lambda b: (0, 0)
    in_specs = [
        pl.BlockSpec((1, L, D), lambda b: (b, 0, 0)),      # x
        pl.BlockSpec((1, R, D), lambda b: (b, 0, 0)),      # p
        pl.BlockSpec((1, 2, L), lambda b: (b, 0, 0)),      # mask keep/neg rows
        pl.BlockSpec((2, D, D + 4), full3),                # packed weights (both blocks)
        pl.BlockSpec((2, D + 2), full2),                   # packed biases  (both blocks)
    ]
    out_specs = [
        pl.BlockSpec((1, L, D), lambda b: (b, 0, 0)),
        pl.BlockSpec((1, R, D), lambda b: (b, 0, 0)),
    ]

    x_new, p_new = pl.pallas_call(
        gat_layer_kernel,
        out_shape=(jax.ShapeDtypeStruct((B, L, D), jnp.float32),
                   jax.ShapeDtypeStruct((B, R, D), jnp.float32)),
        grid_spec=pltpu.PrefetchScalarGridSpec(
            num_scalar_prefetch=0,
            grid=(B,),
            in_specs=in_specs,
            out_specs=out_specs,
        ),
        compiler_params=pltpu.CompilerParams(
            dimension_semantics=("parallel",)),
    )(x, p, mask_kn, w_all, b_all)
    return x_new, p_new


# ----------------------------------------------------------------------------
# Parameter init (same layout as a split PyTorch RelationAttention) + pure-JAX
# reference for correctness checking.
# ----------------------------------------------------------------------------
def init_relation_attention_params(key, D):
    ks = jax.random.split(key, 8)
    s = 0.1
    return {
        "wq":  s * jax.random.normal(ks[0], (D, D), jnp.float32),
        "bq":  s * jax.random.normal(ks[1], (1, D), jnp.float32),
        "wk":  s * jax.random.normal(ks[2], (D, D), jnp.float32),
        "bk":  s * jax.random.normal(ks[3], (1, D), jnp.float32),
        "wv":  s * jax.random.normal(ks[4], (D, D), jnp.float32),
        "bv":  s * jax.random.normal(ks[5], (1, D), jnp.float32),
        # score: Linear(2D, 1) split into the q-part and k-part of cat([q, k])
        "wsq": s * jax.random.normal(ks[6], (D, 1), jnp.float32),
        "wsk": s * jax.random.normal(ks[7], (D, 1), jnp.float32),
        "bs":  jnp.zeros((1, 1), jnp.float32),
        # gate: Linear(2D, 1) split into the out-part and p-part of cat([out, p])
        "wgo": s * jax.random.normal(jax.random.fold_in(key, 100), (D, 1), jnp.float32),
        "wgp": s * jax.random.normal(jax.random.fold_in(key, 101), (D, 1), jnp.float32),
        "bg":  jnp.zeros((1, 1), jnp.float32),
    }


def _ra_ref(q_in, kv_in, mask, prm):
    q = q_in @ prm["wq"] + prm["bq"]
    k = kv_in @ prm["wk"] + prm["bk"]
    v = kv_in @ prm["wv"] + prm["bv"]
    score = (q @ prm["wsq"]) + jnp.swapaxes(k @ prm["wsk"], 1, 2) + prm["bs"][0, 0]
    if mask is not None:
        score = jnp.where(mask[:, None, :] == 0.0, -1e9, score)
    attn = jax.nn.softmax(score, axis=-1)
    out = jnp.einsum("bql,bld->bqd", attn, v) + q_in
    g = jax.nn.sigmoid(out @ prm["wgo"] + q_in @ prm["wgp"] + prm["bg"][0, 0])
    return g * out + (1.0 - g) * q_in


def gat_layer_ref(x, p, mask, prm1, prm2):
    x_new = _ra_ref(x, p, None, prm1) + x
    p_new = _ra_ref(p, x_new, mask, prm2) + p
    return x_new, p_new


if __name__ == "__main__":
    key = jax.random.PRNGKey(0)
    k_x, k_p, k_ra1, k_ra2 = jax.random.split(key, 4)

    B, L, R, D = 2, 8, 4, 32     # batch, seq_len, relation_num, hidden

    x = jax.random.normal(k_x, (B, L, D), jnp.float32)
    p = jax.random.normal(k_p, (B, R, D), jnp.float32)
    # mask: 1 = valid token, 0 = padding (last two tokens of batch 1 masked)
    mask = jnp.ones((B, L), jnp.float32).at[1, -2:].set(0.0)

    params1 = init_relation_attention_params(k_ra1, D)
    params2 = init_relation_attention_params(k_ra2, D)
    packed = pack_gat_params(params1, params2)

    gat = jax.jit(gat_layer)
    x_out, p_out = gat(x, p, mask, packed)
    jax.block_until_ready((x_out, p_out))

    # correctness vs pure-JAX reference (tolerance covers approx reciprocal)
    x_ref, p_ref = gat_layer_ref(x, p, mask, params1, params2)
    assert x_out.shape == (B, L, D) and p_out.shape == (B, R, D)
    assert jnp.all(jnp.isfinite(x_out)) and jnp.all(jnp.isfinite(p_out))
    assert jnp.allclose(x_out, x_ref, rtol=1e-2, atol=1e-2)
    assert jnp.allclose(p_out, p_ref, rtol=1e-2, atol=1e-2)

    print("KERNEL_OK")
</pallas_src>

<mosaic_0001>
module attributes {stable_mosaic.version = 11 : i64} {
  func.func @gat_layer_kernel(%arg0: i32, %arg1: memref<1x8x32xf32, #tpu.memory_space<vmem>>, %arg2: memref<1x4x32xf32, #tpu.memory_space<vmem>>, %arg3: memref<1x2x8xf32, #tpu.memory_space<vmem>>, %arg4: memref<2x32x36xf32, #tpu.memory_space<vmem>>, %arg5: memref<2x34xf32, #tpu.memory_space<vmem>>, %arg6: memref<1x8x32xf32, #tpu.memory_space<vmem>>, %arg7: memref<1x4x32xf32, #tpu.memory_space<vmem>>) attributes {dimension_semantics = [#tpu.dimension_semantics<parallel>], iteration_bounds = array<i64: 2>, scalar_prefetch = 0 : i64, scratch_operands = 0 : i64, tpu.core_type = #tpu.core_type<tc>, window_params = [{transform_indices = @transform_0, window_bounds = array<i64: 1, 8, 32>}, {transform_indices = @transform_1, window_bounds = array<i64: 1, 4, 32>}, {transform_indices = @transform_2, window_bounds = array<i64: 1, 2, 8>}, {pipeline_mode = #tpu.pipeline_mode<synchronous>, transform_indices = @transform_3, window_bounds = array<i64: 2, 32, 36>}, {pipeline_mode = #tpu.pipeline_mode<synchronous>, transform_indices = @transform_4, window_bounds = array<i64: 2, 34>}, {transform_indices = @transform_5, window_bounds = array<i64: 1, 8, 32>}, {transform_indices = @transform_6, window_bounds = array<i64: 1, 4, 32>}]} {
    %c0 = arith.constant 0 : index
    %c0_0 = arith.constant 0 : index
    %c0_1 = arith.constant 0 : index
    %0 = vector.load %arg1[%c0, %c0_0, %c0_1] : memref<1x8x32xf32, #tpu.memory_space<vmem>>, vector<1x8x32xf32>
    %1 = vector.shape_cast %0 : vector<1x8x32xf32> to vector<8x32xf32>
    %c0_2 = arith.constant 0 : index
    %c0_3 = arith.constant 0 : index
    %c0_4 = arith.constant 0 : index
    %2 = vector.load %arg2[%c0_2, %c0_3, %c0_4] : memref<1x4x32xf32, #tpu.memory_space<vmem>>, vector<1x4x32xf32>
    %3 = vector.shape_cast %2 : vector<1x4x32xf32> to vector<4x32xf32>
    %c0_5 = arith.constant 0 : index
    %c0_6 = arith.constant 0 : index
    %c0_7 = arith.constant 0 : index
    %4 = vector.load %arg3[%c0_5, %c0_6, %c0_7] : memref<1x2x8xf32, #tpu.memory_space<vmem>>, vector<1x1x8xf32>
    %5 = vector.shape_cast %4 : vector<1x1x8xf32> to vector<1x8xf32>
    %c0_8 = arith.constant 0 : index
    %c1 = arith.constant 1 : index
    %c0_9 = arith.constant 0 : index
    %6 = vector.load %arg3[%c0_8, %c1, %c0_9] : memref<1x2x8xf32, #tpu.memory_space<vmem>>, vector<1x1x8xf32>
    %7 = vector.shape_cast %6 : vector<1x1x8xf32> to vector<1x8xf32>
    %c0_10 = arith.constant 0 : index
    %c0_11 = arith.constant 0 : index
    %c0_12 = arith.constant 0 : index
    %8 = vector.load %arg4[%c0_10, %c0_11, %c0_12] : memref<2x32x36xf32, #tpu.memory_space<vmem>>, vector<1x32x36xf32>
    %9 = vector.shape_cast %8 : vector<1x32x36xf32> to vector<32x36xf32>
    %c0_13 = arith.constant 0 : index
    %c0_14 = arith.constant 0 : index
    %10 = vector.load %arg5[%c0_13, %c0_14] : memref<2x34xf32, #tpu.memory_space<vmem>>, vector<1x34xf32>
    %11 = vector.extract_strided_slice %10 {offsets = [0, 0], sizes = [1, 32], strides = [1, 1]} : vector<1x34xf32> to vector<1x32xf32>
    %12 = vector.extract_strided_slice %10 {offsets = [0, 32], sizes = [1, 1], strides = [1, 1]} : vector<1x34xf32> to vector<1x1xf32>
    %13 = vector.extract_strided_slice %10 {offsets = [0, 33], sizes = [1, 1], strides = [1, 1]} : vector<1x34xf32> to vector<1x1xf32>
    %cst = arith.constant dense<0.000000e+00> : vector<4x36xf32>
    %14 = tpu.matmul %3, %9, %cst {dimension_numbers = #tpu.dot_dimension_numbers<[1], [0], [0], [1], [0, 0, 1, 1], [], []>} : vector<4x32xf32>, vector<32x36xf32>, vector<4x36xf32> -> vector<4x36xf32>
    %15 = vector.extract_strided_slice %14 {offsets = [0, 0], sizes = [4, 32], strides = [1, 1]} : vector<4x36xf32> to vector<4x32xf32>
    %16 = vector.broadcast %11 : vector<1x32xf32> to vector<4x32xf32>
    %17 = arith.addf %15, %16 : vector<4x32xf32>
    %18 = vector.extract_strided_slice %14 {offsets = [0, 32], sizes = [4, 1], strides = [1, 1]} : vector<4x36xf32> to vector<4x1xf32>
    %cst_15 = arith.constant dense<0.000000e+00> : vector<8x36xf32>
    %19 = tpu.matmul %1, %9, %cst_15 {dimension_numbers = #tpu.dot_dimension_numbers<[1], [0], [0], [1], [0, 0, 1, 1], [], []>} : vector<8x32xf32>, vector<32x36xf32>, vector<8x36xf32> -> vector<8x36xf32>
    %20 = vector.extract_strided_slice %19 {offsets = [0, 33], sizes = [8, 1], strides = [1, 1]} : vector<8x36xf32> to vector<8x1xf32>
    %21 = vector.extract_strided_slice %19 {offsets = [0, 34], sizes = [8, 1], strides = [1, 1]} : vector<8x36xf32> to vector<8x1xf32>
    %22 = tpu.transpose %18, [1, 0] : vector<4x1xf32> -> vector<1x4xf32>
    %23 = vector.broadcast %20 : vector<8x1xf32> to vector<8x4xf32>
    %24 = vector.broadcast %22 : vector<1x4xf32> to vector<8x4xf32>
    %25 = arith.addf %23, %24 : vector<8x4xf32>
    %26 = vector.broadcast %12 : vector<1x1xf32> to vector<8x4xf32>
    %27 = arith.addf %25, %26 : vector<8x4xf32>
    %cst_16 = arith.constant dense<0xFF800000> : vector<8xf32>
    %28 = vector.multi_reduction <maximumf>, %27, %cst_16 [1] : vector<8x4xf32> to vector<8xf32>
    %29 = vector.shape_cast %28 : vector<8xf32> to vector<8x1xf32>
    %30 = vector.broadcast %29 : vector<8x1xf32> to vector<8x4xf32>
    %31 = arith.subf %27, %30 : vector<8x4xf32>
    %32 = math.exp %31 : vector<8x4xf32>
    %cst_17 = arith.constant dense<0.000000e+00> : vector<8xf32>
    %33 = vector.multi_reduction <add>, %32, %cst_17 [1] : vector<8x4xf32> to vector<8xf32>
    %34 = vector.shape_cast %33 : vector<8xf32> to vector<8x1xf32>
    %35 = tpu.reciprocal %34 {approx = true} : vector<8x1xf32> -> vector<8x1xf32>
    %36 = vector.broadcast %35 : vector<8x1xf32> to vector<8x4xf32>
    %37 = arith.mulf %32, %36 : vector<8x4xf32>
    %cst_18 = arith.constant dense<0.000000e+00> : vector<8x32xf32>
    %38 = tpu.matmul %37, %17, %cst_18 {dimension_numbers = #tpu.dot_dimension_numbers<[1], [0], [0], [1], [0, 0, 1, 1], [], []>} : vector<8x4xf32>, vector<4x32xf32>, vector<8x32xf32> -> vector<8x32xf32>
    %39 = arith.addf %38, %1 : vector<8x32xf32>
    %cst_19 = arith.constant dense<0.000000e+00> : vector<8x36xf32>
    %40 = tpu.matmul %39, %9, %cst_19 {dimension_numbers = #tpu.dot_dimension_numbers<[1], [0], [0], [1], [0, 0, 1, 1], [], []>} : vector<8x32xf32>, vector<32x36xf32>, vector<8x36xf32> -> vector<8x36xf32>
    %41 = vector.extract_strided_slice %40 {offsets = [0, 35], sizes = [8, 1], strides = [1, 1]} : vector<8x36xf32> to vector<8x1xf32>
    %42 = arith.addf %41, %21 : vector<8x1xf32>
    %43 = vector.broadcast %13 : vector<1x1xf32> to vector<8x1xf32>
    %44 = arith.addf %42, %43 : vector<8x1xf32>
    %45 = arith.negf %44 : vector<8x1xf32>
    %46 = math.exp %45 : vector<8x1xf32>
    %cst_20 = arith.constant 1.000000e+00 : f32
    %47 = vector.broadcast %cst_20 : f32 to vector<8x1xf32>
    %48 = arith.addf %47, %46 : vector<8x1xf32>
    %49 = arith.divf %47, %48 : vector<8x1xf32>
    %50 = vector.broadcast %49 : vector<8x1xf32> to vector<8x32xf32>
    %51 = arith.mulf %50, %39 : vector<8x32xf32>
    %cst_21 = arith.constant 1.000000e+00 : f32
    %52 = vector.broadcast %cst_21 : f32 to vector<8x1xf32>
    %53 = arith.subf %52, %49 : vector<8x1xf32>
    %54 = vector.broadcast %53 : vector<8x1xf32> to vector<8x32xf32>
    %55 = arith.mulf %54, %1 : vector<8x32xf32>
    %56 = arith.addf %51, %55 : vector<8x32xf32>
    %57 = arith.addf %56, %1 : vector<8x32xf32>
    %c1_22 = arith.constant 1 : index
    %c0_23 = arith.constant 0 : index
    %c0_24 = arith.constant 0 : index
    %58 = vector.load %arg4[%c1_22, %c0_23, %c0_24] : memref<2x32x36xf32, #tpu.memory_space<vmem>>, vector<1x32x36xf32>
    %59 = vector.shape_cast %58 : vector<1x32x36xf32> to vector<32x36xf32>
    %c1_25 = arith.constant 1 : index
    %c0_26 = arith.constant 0 : index
    %60 = vector.load %arg5[%c1_25, %c0_26] : memref<2x34xf32, #tpu.memory_space<vmem>>, vector<1x34xf32>
    %61 = vector.extract_strided_slice %60 {offsets = [0, 0], sizes = [1, 32], strides = [1, 1]} : vector<1x34xf32> to vector<1x32xf32>
    %62 = vector.extract_strided_slice %60 {offsets = [0, 32], sizes = [1, 1], strides = [1, 1]} : vector<1x34xf32> to vector<1x1xf32>
    %63 = vector.extract_strided_slice %60 {offsets = [0, 33], sizes = [1, 1], strides = [1, 1]} : vector<1x34xf32> to vector<1x1xf32>
    %cst_27 = arith.constant dense<0.000000e+00> : vector<8x36xf32>
    %64 = tpu.matmul %57, %59, %cst_27 {dimension_numbers = #tpu.dot_dimension_numbers<[1], [0], [0], [1], [0, 0, 1, 1], [], []>} : vector<8x32xf32>, vector<32x36xf32>, vector<8x36xf32> -> vector<8x36xf32>
    %65 = vector.extract_strided_slice %64 {offsets = [0, 0], sizes = [8, 32], strides = [1, 1]} : vector<8x36xf32> to vector<8x32xf32>
    %66 = vector.broadcast %61 : vector<1x32xf32> to vector<8x32xf32>
    %67 = arith.addf %65, %66 : vector<8x32xf32>
    %68 = vector.extract_strided_slice %64 {offsets = [0, 32], sizes = [8, 1], strides = [1, 1]} : vector<8x36xf32> to vector<8x1xf32>
    %cst_28 = arith.constant dense<0.000000e+00> : vector<4x36xf32>
    %69 = tpu.matmul %3, %59, %cst_28 {dimension_numbers = #tpu.dot_dimension_numbers<[1], [0], [0], [1], [0, 0, 1, 1], [], []>} : vector<4x32xf32>, vector<32x36xf32>, vector<4x36xf32> -> vector<4x36xf32>
    %70 = vector.extract_strided_slice %69 {offsets = [0, 33], sizes = [4, 1], strides = [1, 1]} : vector<4x36xf32> to vector<4x1xf32>
    %71 = vector.extract_strided_slice %69 {offsets = [0, 34], sizes = [4, 1], strides = [1, 1]} : vector<4x36xf32> to vector<4x1xf32>
    %72 = tpu.transpose %68, [1, 0] : vector<8x1xf32> -> vector<1x8xf32>
    %73 = vector.broadcast %70 : vector<4x1xf32> to vector<4x8xf32>
    %74 = vector.broadcast %72 : vector<1x8xf32> to vector<4x8xf32>
    %75 = arith.addf %73, %74 : vector<4x8xf32>
    %76 = vector.broadcast %62 : vector<1x1xf32> to vector<4x8xf32>
    %77 = arith.addf %75, %76 : vector<4x8xf32>
    %78 = vector.broadcast %5 : vector<1x8xf32> to vector<4x8xf32>
    %79 = arith.mulf %77, %78 : vector<4x8xf32>
    %80 = vector.broadcast %7 : vector<1x8xf32> to vector<4x8xf32>
    %81 = arith.addf %79, %80 : vector<4x8xf32>
    %cst_29 = arith.constant dense<0xFF800000> : vector<4xf32>
    %82 = vector.multi_reduction <maximumf>, %81, %cst_29 [1] : vector<4x8xf32> to vector<4xf32>
    %83 = vector.shape_cast %82 : vector<4xf32> to vector<4x1xf32>
    %84 = vector.broadcast %83 : vector<4x1xf32> to vector<4x8xf32>
    %85 = arith.subf %81, %84 : vector<4x8xf32>
    %86 = math.exp %85 : vector<4x8xf32>
    %cst_30 = arith.constant dense<0.000000e+00> : vector<4xf32>
    %87 = vector.multi_reduction <add>, %86, %cst_30 [1] : vector<4x8xf32> to vector<4xf32>
    %88 = vector.shape_cast %87 : vector<4xf32> to vector<4x1xf32>
    %89 = tpu.reciprocal %88 {approx = true} : vector<4x1xf32> -> vector<4x1xf32>
    %90 = vector.broadcast %89 : vector<4x1xf32> to vector<4x8xf32>
    %91 = arith.mulf %86, %90 : vector<4x8xf32>
    %cst_31 = arith.constant dense<0.000000e+00> : vector<4x32xf32>
    %92 = tpu.matmul %91, %67, %cst_31 {dimension_numbers = #tpu.dot_dimension_numbers<[1], [0], [0], [1], [0, 0, 1, 1], [], []>} : vector<4x8xf32>, vector<8x32xf32>, vector<4x32xf32> -> vector<4x32xf32>
    %93 = arith.addf %92, %3 : vector<4x32xf32>
    %cst_32 = arith.constant dense<0.000000e+00> : vector<4x36xf32>
    %94 = tpu.matmul %93, %59, %cst_32 {dimension_numbers = #tpu.dot_dimension_numbers<[1], [0], [0], [1], [0, 0, 1, 1], [], []>} : vector<4x32xf32>, vector<32x36xf32>, vector<4x36xf32> -> vector<4x36xf32>
    %95 = vector.extract_strided_slice %94 {offsets = [0, 35], sizes = [4, 1], strides = [1, 1]} : vector<4x36xf32> to vector<4x1xf32>
    %96 = arith.addf %95, %71 : vector<4x1xf32>
    %97 = vector.broadcast %63 : vector<1x1xf32> to vector<4x1xf32>
    %98 = arith.addf %96, %97 : vector<4x1xf32>
    %99 = arith.negf %98 : vector<4x1xf32>
    %100 = math.exp %99 : vector<4x1xf32>
    %cst_33 = arith.constant 1.000000e+00 : f32
    %101 = vector.broadcast %cst_33 : f32 to vector<4x1xf32>
    %102 = arith.addf %101, %100 : vector<4x1xf32>
    %103 = arith.divf %101, %102 : vector<4x1xf32>
    %104 = vector.broadcast %103 : vector<4x1xf32> to vector<4x32xf32>
    %105 = arith.mulf %104, %93 : vector<4x32xf32>
    %cst_34 = arith.constant 1.000000e+00 : f32
    %106 = vector.broadcast %cst_34 : f32 to vector<4x1xf32>
    %107 = arith.subf %106, %103 : vector<4x1xf32>
    %108 = vector.broadcast %107 : vector<4x1xf32> to vector<4x32xf32>
    %109 = arith.mulf %108, %3 : vector<4x32xf32>
    %110 = arith.addf %105, %109 : vector<4x32xf32>
    %111 = arith.addf %110, %3 : vector<4x32xf32>
    %c0_35 = arith.constant 0 : index
    %c0_36 = arith.constant 0 : index
    %c0_37 = arith.constant 0 : index
    %112 = vector.load %arg6[%c0_35, %c0_36, %c0_37] : memref<1x8x32xf32, #tpu.memory_space<vmem>>, vector<1x8x32xf32>
    %113 = vector.shape_cast %112 : vector<1x8x32xf32> to vector<8x32xf32>
    %114 = vector.shape_cast %57 : vector<8x32xf32> to vector<1x8x32xf32>
    tpu.vector_store %arg6[%c0_35, %c0_36, %c0_37], %114 {strides = array<i32>} : memref<1x8x32xf32, #tpu.memory_space<vmem>>, vector<1x8x32xf32>,
    %c0_38 = arith.constant 0 : index
    %c0_39 = arith.constant 0 : index
    %c0_40 = arith.constant 0 : index
    %115 = vector.load %arg7[%c0_38, %c0_39, %c0_40] : memref<1x4x32xf32, #tpu.memory_space<vmem>>, vector<1x4x32xf32>
    %116 = vector.shape_cast %115 : vector<1x4x32xf32> to vector<4x32xf32>
    %117 = vector.shape_cast %111 : vector<4x32xf32> to vector<1x4x32xf32>
    tpu.vector_store %arg7[%c0_38, %c0_39, %c0_40], %117 {strides = array<i32>} : memref<1x4x32xf32, #tpu.memory_space<vmem>>, vector<1x4x32xf32>,
    return
  }
  func.func @transform_0(%arg0: i32) -> (i32, i32, i32) {
    %c0_i32 = arith.constant 0 : i32
    %c0_i32_0 = arith.constant 0 : i32
    %c0_i32_1 = arith.constant 0 : i32
    return %arg0, %c0_i32, %c0_i32_0 : i32, i32, i32
  }
  func.func @transform_1(%arg0: i32) -> (i32, i32, i32) {
    %c0_i32 = arith.constant 0 : i32
    %c0_i32_0 = arith.constant 0 : i32
    %c0_i32_1 = arith.constant 0 : i32
    return %arg0, %c0_i32, %c0_i32_0 : i32, i32, i32
  }
  func.func @transform_2(%arg0: i32) -> (i32, i32, i32) {
    %c0_i32 = arith.constant 0 : i32
    %c0_i32_0 = arith.constant 0 : i32
    %c0_i32_1 = arith.constant 0 : i32
    return %arg0, %c0_i32, %c0_i32_0 : i32, i32, i32
  }
  func.func @transform_3(%arg0: i32) -> (i32, i32, i32) {
    %c0_i32 = arith.constant 0 : i32
    %c0_i32_0 = arith.constant 0 : i32
    %c0_i32_1 = arith.constant 0 : i32
    %c0_i32_2 = arith.constant 0 : i32
    return %c0_i32, %c0_i32_0, %c0_i32_1 : i32, i32, i32
  }
  func.func @transform_4(%arg0: i32) -> (i32, i32) {
    %c0_i32 = arith.constant 0 : i32
    %c0_i32_0 = arith.constant 0 : i32
    %c0_i32_1 = arith.constant 0 : i32
    return %c0_i32, %c0_i32_0 : i32, i32
  }
  func.func @transform_5(%arg0: i32) -> (i32, i32, i32) {
    %c0_i32 = arith.constant 0 : i32
    %c0_i32_0 = arith.constant 0 : i32
    %c0_i32_1 = arith.constant 0 : i32
    return %arg0, %c0_i32, %c0_i32_0 : i32, i32, i32
  }
  func.func @transform_6(%arg0: i32) -> (i32, i32, i32) {
    %c0_i32 = arith.constant 0 : i32
    %c0_i32_0 = arith.constant 0 : i32
    %c0_i32_1 = arith.constant 0 : i32
    return %arg0, %c0_i32, %c0_i32_0 : i32, i32, i32
  }
}

</mosaic_0001>

<llo_original>
// kernel: gat_layer.1
$region0: #{gat_layer.1}
  #allocation0 [shape = 'u32[]', space=smem, size = 0x4, offset = 0x4, fixed_abs, tag = 'smem constant byte address 0x4 - core index']
  #allocation1 [shape = 'u32[144,128]{1,0:T(1,128)}', space=vmem, size = 0x12000, scoped, tag = 'internal scratch']
  %s0 = inlined_call_operand.vmem [shape: f32[2,8,32], index: 0, kind: input, shape index: {}]
  %s1 = inlined_call_operand.hbm [shape: f32[2,4,32], index: 1, kind: input, shape index: {}]
  %s2 = inlined_call_operand.vmem [shape: f32[2,2,8], index: 2, kind: input, shape index: {}]
  %s3 = inlined_call_operand.hbm [shape: f32[2,32,36], index: 3, kind: input, shape index: {}]
  %s4 = inlined_call_operand.vmem [shape: f32[2,34], index: 4, kind: input, shape index: {}]
  %s5 = inlined_call_operand.hbm [shape: f32[2,8,32], index: 5, kind: output, shape index: {0}]
  %s6 = inlined_call_operand.hbm [shape: f32[2,4,32], index: 6, kind: output, shape index: {1}]
  %7 = xla_tuple %s5, %s6
  %s8 = sld [smem:[#allocation0]]
  $region69: #{gat_layer.1} parent=0
    _
  %s10 = ssub.s32 1, %s8
  %s11 = scalar_select 0, %s10, %s8
  $region1: #{gat_layer.1} parent=0
    #allocation2 [shape = 'u8[4096]{0}', space=vmem, size = 0x1000, scoped, tag = 'input window, operand 1']
    #allocation3 [shape = 's32[2]{0}', space=sflag, size = 0x8, scoped, tag = 'scoped memory for gat_layer.1']
    #allocation4 [shape = 's32[2]{0}', space=sflag, size = 0x8, scoped, tag = 'scoped memory for gat_layer.1']
    #allocation5 [shape = 'u8[32768]{0}', space=vmem, size = 0x8000, scoped, tag = 'input window, operand 3, single buffered']
    #allocation6 [shape = 's32[1]{0}', space=sflag, size = 0x4, scoped, tag = 'scoped memory for gat_layer.1']
    #allocation7 [shape = 'u8[8192]{0}', space=vmem, size = 0x2000, scoped, tag = 'output window, operand 0']
    #allocation8 [shape = 'u8[4096]{0}', space=vmem, size = 0x1000, scoped, tag = 'output window, operand 1']
    #allocation9 [shape = 's32[2]{0}', space=sflag, size = 0x8, scoped, tag = 'scoped memory for gat_layer.1']
    %12 = vsyncpa [#allocation3], 0
    %s13 = scalar_lea.sflag [#allocation3], 1
    %14 = vsyncpa %s13, 0
    %15 = vsyncpa [#allocation6], 0
    %16 = vsyncpa [#allocation4], 0
    %s17 = scalar_lea.sflag [#allocation4], 1
    %18 = vsyncpa %s17, 0
    %19 = vsyncpa [#allocation9], 0
    %s20 = scalar_lea.sflag [#allocation9], 1
    %21 = vsyncpa %s20, 0
    loop: start=0, step=1, limit=4
    $region2: #{gat_layer.1} parent=1 // loop_pre_header
      _
    $region3: #{gat_layer.1} parent=1 // loop_header
      %s23 = sphi 0, %s27
      %p24 = scmp.ge.s32.totalorder %s23, 4
      %s33 = sphi 0, %s35
      %s36 = sphi 0, %s33
      %s37 = sphi 0, %s36
      %s53 = sphi 0, %s37
      %s59 = sphi 0, %s61
      %s62 = sphi 0, %s59
      %s63 = sphi 0, %s62
      %s79 = sphi 0, %s63
      %s85 = sphi 0, %s87
      %s88 = sphi 0, %s85
      %s89 = sphi 0, %s88
      %s105 = sphi 0, %s89
      %s109 = sphi 0, %s109
      %s111 = sphi 0, %s109
      %s112 = sphi 0, %s111
      %s126 = sphi 0, %s112
      %s130 = sphi 0, %s130
      %s132 = sphi 0, %s130
      %s133 = sphi 0, %s132
      %s147 = sphi 0, %s133
      %s153 = sphi 0, %s155
      %s156 = sphi 0, %s153
      %s157 = sphi 0, %s156
      %s173 = sphi 0, %s157
      %s179 = sphi 0, %s181
      %s182 = sphi 0, %s179
      %s183 = sphi 0, %s182
      %s199 = sphi 0, %s183
    $region4: #{gat_layer.1} parent=1 // loop_header_branch
      %26 = sbr.rel (%p24) target = $region8
    $region5: #{gat_layer.1} parent=1 // loop_body
      %s28 = ssub.s32 %s23, 1
      %s29 = ssub.s32 %s23, 2
      %s30 = sadd.s32 %s23, 1
      %s31 = ssub.s32 %s23, %s30
      %p32 = scmp.eq.s32.totalorder %s31, 0
      %s34 = sadd.s32 %s33, 1
      %s35 = scalar_select %p32, %s33, %s34
      %p38 = pneg %p32
      %p39 = scmp.eq.s32.totalorder %s23, 1
      %p40 = por %p38, %p39
      %p41 = scmp.ne.s32.totalorder %s33, %s36
      %p42 = scmp.eq.s32.totalorder %s23, 0
      %p43 = por %p41, %p42
      %p44 = scmp.ne.s32.totalorder %s33, %s36
      %p45 = scmp.eq.s32.totalorder %s28, 1
      %p46 = por %p44, %p45
      %p47 = scmp.ne.s32.totalorder %s36, %s37
      %p48 = scmp.eq.s32.totalorder %s28, 0
      %p49 = por %p47, %p48
      %p50 = scmp.ne.s32.totalorder %s36, %s37
      %p51 = scmp.eq.s32.totalorder %s29, 1
      %p52 = por %p50, %p51
      %p54 = scmp.ne.s32.totalorder %s37, %s53
      %p55 = scmp.eq.s32.totalorder %s29, 0
      %p56 = por %p54, %p55
      %s57 = ssub.s32 %s23, %s30
      %p58 = scmp.eq.s32.totalorder %s57, 0
      %s60 = sadd.s32 %s59, 1
      %s61 = scalar_select %p58, %s59, %s60
      %p64 = pneg %p58
      %p65 = scmp.eq.s32.totalorder %s23, 1
      %p66 = por %p64, %p65
      %p67 = scmp.ne.s32.totalorder %s59, %s62
      %p68 = scmp.eq.s32.totalorder %s23, 0
      %p69 = por %p67, %p68
      %p70 = scmp.ne.s32.totalorder %s59, %s62
      %p71 = scmp.eq.s32.totalorder %s28, 1
      %p72 = por %p70, %p71
      %p73 = scmp.ne.s32.totalorder %s62, %s63
      %p74 = scmp.eq.s32.totalorder %s28, 0
      %p75 = por %p73, %p74
      %p76 = scmp.ne.s32.totalorder %s62, %s63
      %p77 = scmp.eq.s32.totalorder %s29, 1
      %p78 = por %p76, %p77
      %p80 = scmp.ne.s32.totalorder %s63, %s79
      %p81 = scmp.eq.s32.totalorder %s29, 0
      %p82 = por %p80, %p81
      %s83 = ssub.s32 %s23, %s30
      %p84 = scmp.eq.s32.totalorder %s83, 0
      %s86 = sadd.s32 %s85, 1
      %s87 = scalar_select %p84, %s85, %s86
      %p90 = pneg %p84
      %p91 = scmp.eq.s32.totalorder %s23, 1
      %p92 = por %p90, %p91
      %p93 = scmp.ne.s32.totalorder %s85, %s88
      %p94 = scmp.eq.s32.totalorder %s23, 0
      %p95 = por %p93, %p94
      %p96 = scmp.ne.s32.totalorder %s85, %s88
      %p97 = scmp.eq.s32.totalorder %s28, 1
      %p98 = por %p96, %p97
      %p99 = scmp.ne.s32.totalorder %s88, %s89
      %p100 = scmp.eq.s32.totalorder %s28, 0
      %p101 = por %p99, %p100
      %p102 = scmp.ne.s32.totalorder %s88, %s89
      %p103 = scmp.eq.s32.totalorder %s29, 1
      %p104 = por %p102, %p103
      %p106 = scmp.ne.s32.totalorder %s89, %s105
      %p107 = scmp.eq.s32.totalorder %s29, 0
      %p108 = por %p106, %p107
      %s110 = sadd.s32 %s109, 1
      %p113 = scmp.eq.s32.totalorder %s23, 1
      %p114 = scmp.ne.s32.totalorder %s109, %s111
      %p115 = scmp.eq.s32.totalorder %s23, 0
      %p116 = por %p114, %p115
      %p117 = scmp.ne.s32.totalorder %s109, %s111
      %p118 = scmp.eq.s32.totalorder %s28, 1
      %p119 = por %p117, %p118
      %p120 = scmp.ne.s32.totalorder %s111, %s112
      %p121 = scmp.eq.s32.totalorder %s28, 0
      %p122 = por %p120, %p121
      %p123 = scmp.ne.s32.totalorder %s111, %s112
      %p124 = scmp.eq.s32.totalorder %s29, 1
      %p125 = por %p123, %p124
      %p127 = scmp.ne.s32.totalorder %s112, %s126
      %p128 = scmp.eq.s32.totalorder %s29, 0
      %p129 = por %p127, %p128
      %s131 = sadd.s32 %s130, 1
      %p134 = scmp.eq.s32.totalorder %s23, 1
      %p135 = scmp.ne.s32.totalorder %s130, %s132
      %p136 = scmp.eq.s32.totalorder %s23, 0
      %p137 = por %p135, %p136
      %p138 = scmp.ne.s32.totalorder %s130, %s132
      %p139 = scmp.eq.s32.totalorder %s28, 1
      %p140 = por %p138, %p139
      %p141 = scmp.ne.s32.totalorder %s132, %s133
      %p142 = scmp.eq.s32.totalorder %s28, 0
      %p143 = por %p141, %p142
      %p144 = scmp.ne.s32.totalorder %s132, %s133
      %p145 = scmp.eq.s32.totalorder %s29, 1
      %p146 = por %p144, %p145
      %p148 = scmp.ne.s32.totalorder %s133, %s147
      %p149 = scmp.eq.s32.totalorder %s29, 0
      %p150 = por %p148, %p149
      %s151 = ssub.s32 %s23, %s30
      %p152 = scmp.eq.s32.totalorder %s151, 0
      %s154 = sadd.s32 %s153, 1
      %s155 = scalar_select %p152, %s153, %s154
      %p158 = pneg %p152
      %p159 = scmp.eq.s32.totalorder %s23, 1
      %p160 = por %p158, %p159
      %p161 = scmp.ne.s32.totalorder %s153, %s156
      %p162 = scmp.eq.s32.totalorder %s23, 0
      %p163 = por %p161, %p162
      %p164 = scmp.ne.s32.totalorder %s153, %s156
      %p165 = scmp.eq.s32.totalorder %s28, 1
      %p166 = por %p164, %p165
      %p167 = scmp.ne.s32.totalorder %s156, %s157
      %p168 = scmp.eq.s32.totalorder %s28, 0
      %p169 = por %p167, %p168
      %p170 = scmp.ne.s32.totalorder %s156, %s157
      %p171 = scmp.eq.s32.totalorder %s29, 1
      %p172 = por %p170, %p171
      %p174 = scmp.ne.s32.totalorder %s157, %s173
      %p175 = scmp.eq.s32.totalorder %s29, 0
      %p176 = por %p174, %p175
      %s177 = ssub.s32 %s23, %s30
      %p178 = scmp.eq.s32.totalorder %s177, 0
      %s180 = sadd.s32 %s179, 1
      %s181 = scalar_select %p178, %s179, %s180
      %p184 = pneg %p178
      %p185 = scmp.eq.s32.totalorder %s23, 1
      %p186 = por %p184, %p185
      %p187 = scmp.ne.s32.totalorder %s179, %s182
      %p188 = scmp.eq.s32.totalorder %s23, 0
      %p189 = por %p187, %p188
      %p190 = scmp.ne.s32.totalorder %s179, %s182
      %p191 = scmp.eq.s32.totalorder %s28, 1
      %p192 = por %p190, %p191
      %p193 = scmp.ne.s32.totalorder %s182, %s183
      %p194 = scmp.eq.s32.totalorder %s28, 0
      %p195 = por %p193, %p194
      %p196 = scmp.ne.s32.totalorder %s182, %s183
      %p197 = scmp.eq.s32.totalorder %s29, 1
      %p198 = por %p196, %p197
      %p200 = scmp.ne.s32.totalorder %s183, %s199
      %p201 = scmp.eq.s32.totalorder %s29, 0
      %p202 = por %p200, %p201
      %p203 = scmp.le.s32.totalorder 1, %s23
      %p204 = scmp.lt.s32.totalorder %s23, 3
      %p205 = pnand %p203, %p204
      %p206 = pneg %p205
      // Predicated region
      $region9: #{gat_layer.1} parent=5 // pred_check
        _
      $region10: #{gat_layer.1} parent=5 // pred_check_branch
        %208 = sbr.rel (%p205) target = $region12
      $region11: #{gat_layer.1} parent=5 // pred_region
        %s209 = ssub.s32 %s23, 1
        // Predicated region
        $region13: #{gat_layer.1} parent=11 // pred_check
          %p210 = pneg %p122
        $region14: #{gat_layer.1} parent=11 // pred_check_branch
          %212 = sbr.rel (%p210) target = $region16
        $region15: #{gat_layer.1} parent=11 // pred_region
          %s214 = ssub.s32 1024, 1024
          %215 = vsyncadd [#allocation6], %s214
          %s216 = sshll.u32 [#allocation5], 4
          %s217 = int_to_ptr.vmem [resolvable:$true] %s216
          %222 = dma.hbm_to_vmem [thread:$0]  %s3, 1024, %s217, [#allocation6], 128, 128, 8
        $region16: #{gat_layer.1} parent=11 // pred_fallthru
          _
        // Predicated region
        $region17: #{gat_layer.1} parent=11 // pred_check
          %p223 = pneg %p143
        $region18: #{gat_layer.1} parent=11 // pred_check_branch
          %225 = sbr.rel (%p223) target = $region20
        $region19: #{gat_layer.1} parent=11 // pred_region
          _
        $region20: #{gat_layer.1} parent=11 // pred_fallthru
          _
      $region12: #{gat_layer.1} parent=5 // pred_fallthru
        _
      %p226 = scmp.lt.s32.totalorder %s23, 2
      // Predicated region
      $region21: #{gat_layer.1} parent=5 // pred_check
        %p227 = pneg %p226
      $region22: #{gat_layer.1} parent=5 // pred_check_branch
        %229 = sbr.rel (%p227) target = $region24
      $region23: #{gat_layer.1} parent=5 // pred_region
        // Predicated region
        $region25: #{gat_layer.1} parent=23 // pred_check
          %p230 = pneg %p43
        $region26: #{gat_layer.1} parent=23 // pred_check_branch
          %232 = sbr.rel (%p230) target = $region28
        $region27: #{gat_layer.1} parent=23 // pred_region
          %p233 = scmp.lt.s32.totalorder %s23, 1
          %s234 = scalar_select %p233, %s23, 1
          %s235 = smul.addr %s234, 8
          %s236 = scalar_lea.vmem %s0, %s235
        $region28: #{gat_layer.1} parent=23 // pred_fallthru
          _
        // Predicated region
        $region29: #{gat_layer.1} parent=23 // pred_check
          %p237 = pneg %p69
        $region30: #{gat_layer.1} parent=23 // pred_check_branch
          %239 = sbr.rel (%p237) target = $region32
        $region31: #{gat_layer.1} parent=23 // pred_region
          %s240 = sand.u32 %s59, 1
          %s241 = scalar_lea.sflag [#allocation3], %s240
          %s242 = sand.u32 %s59, 1
          %s243 = smul.addr %s242, 4
          %s244 = scalar_lea.vmem [#allocation2], %s243
          %s246 = ssub.s32 64, 64
          %247 = vsyncadd %s241, %s246
          %s248 = smul.addr %s23, 64
          %s249 = scalar_lea.hbm %s1, %s248
          %s251 = sshll.u32 %s244, 4
          %s252 = int_to_ptr.vmem [resolvable:$true] %s251
          %254 = dma.hbm_to_vmem [thread:$0]  %s249, 64, %s252, %s241
        $region32: #{gat_layer.1} parent=23 // pred_fallthru
          _
        // Predicated region
        $region33: #{gat_layer.1} parent=23 // pred_check
          %p255 = pneg %p95
        $region34: #{gat_layer.1} parent=23 // pred_check_branch
          %257 = sbr.rel (%p255) target = $region36
        $region35: #{gat_layer.1} parent=23 // pred_region
          %p258 = scmp.lt.s32.totalorder %s23, 1
          %s259 = scalar_select %p258, %s23, 1
          %s260 = smul.addr %s259, 2
          %s261 = scalar_lea.vmem %s2, %s260
        $region36: #{gat_layer.1} parent=23 // pred_fallthru
          _
      $region24: #{gat_layer.1} parent=5 // pred_fallthru
        _
      %p262 = scmp.le.s32.totalorder 1, %s23
      %p263 = scmp.lt.s32.totalorder %s23, 3
      %p264 = pnand %p262, %p263
      %p265 = pneg %p264
      // Predicated region
      $region37: #{gat_layer.1} parent=5 // pred_check
        _
      $region38: #{gat_layer.1} parent=5 // pred_check_branch
        %267 = sbr.rel (%p264) target = $region40
      $region39: #{gat_layer.1} parent=5 // pred_region
        %s268 = ssub.s32 %s23, 1
        %s269 = sand.u32 %s62, 1
        %s270 = scalar_lea.sflag [#allocation3], %s269
        %s271 = sand.u32 %s62, 1
        %s272 = smul.addr %s271, 4
        %s273 = scalar_lea.vmem [#allocation2], %s272
        // Predicated region
        $region41: #{gat_layer.1} parent=39 // pred_check
          %p274 = pneg %p75
        $region42: #{gat_layer.1} parent=39 // pred_check_branch
          %276 = sbr.rel (%p274) target = $region44
        $region43: #{gat_layer.1} parent=39 // pred_region
          %277 = dma.done %s270, 64
        $region44: #{gat_layer.1} parent=39 // pred_fallthru
          _
        // Predicated region
        $region45: #{gat_layer.1} parent=39 // pred_check
          %p278 = pneg %p122
        $region46: #{gat_layer.1} parent=39 // pred_check_branch
          %280 = sbr.rel (%p278) target = $region48
        $region47: #{gat_layer.1} parent=39 // pred_region
          %281 = dma.done [#allocation6], 1024
        $region48: #{gat_layer.1} parent=39 // pred_fallthru
          _
        %p282 = scmp.lt.s32.totalorder %s28, 1
        %s283 = scalar_select %p282, %s28, 1
        %s284 = smul.addr %s283, 8
        %s285 = scalar_lea.vmem %s0, %s284
        %p286 = pneg %p49
        %p287 = pneg %p46
        %s288 = sand.u32 %s62, 1
        %s289 = scalar_lea.sflag [#allocation3], %s288
        %s290 = sand.u32 %s62, 1
        %s291 = smul.addr %s290, 4
        %s292 = scalar_lea.vmem [#allocation2], %s291
        %p293 = pneg %p75
        %p294 = pneg %p72
        %p295 = scmp.lt.s32.totalorder %s28, 1
        %s296 = scalar_select %p295, %s28, 1
        %s297 = smul.addr %s296, 2
        %s298 = scalar_lea.vmem %s2, %s297
        %p299 = pneg %p101
        %p300 = pneg %p98
        %p301 = pneg %p122
        %p302 = pneg %p119
        %p303 = pneg %p143
        %p304 = pneg %p140
        %p305 = pneg %p169
        %p306 = pneg %p166
        %s307 = sand.u32 %s156, 1
        %s308 = scalar_lea.sflag [#allocation4], %s307
        %s309 = sand.u32 %s156, 1
        %s310 = smul.addr %s309, 8
        %s311 = scalar_lea.vmem [#allocation7], %s310
        %p312 = pneg %p195
        %p313 = pneg %p192
        %s314 = sand.u32 %s182, 1
        %s315 = scalar_lea.sflag [#allocation9], %s314
        %s316 = sand.u32 %s182, 1
        %s317 = smul.addr %s316, 4
        %s318 = scalar_lea.vmem [#allocation8], %s317
        %p319 = scmp.lt.s32.totalorder %s28, 1
        %s320 = scalar_select %p319, %s28, 1
        %s321 = smul.addr %s320, 8
        %s322 = scalar_lea.vmem %s0, %s321
        %p323 = scmp.lt.s32.totalorder %s28, 1
        %s324 = scalar_select %p323, %s28, 1
        %s325 = smul.addr %s324, 2
        %s326 = scalar_lea.vmem %s2, %s325
        %v327 = vld [vmem:[%s322] sm:$0xff]
        %v328 = vld [vmem:[%s273] sm:$0xf]
        %v329 = vld [vmem:[%s326] sm:$0x1]
        %v330 = vld [vmem:[%s326 + $0x1] sm:$0x1]
        %v331 = vld [vmem:[#allocation5] sm:$0xff]
        %v332 = vld [vmem:[#allocation5 + $0x8] sm:$0xff]
        %v333 = vld [vmem:[#allocation5 + $0x10] sm:$0xff]
        %v334 = vld [vmem:[#allocation5 + $0x18] sm:$0xff]
        %v335 = vld [vmem:[%s4] sm:$0x1]
        %vm336 = vcmask 261120
        %v338 = vsel %vm336, %v328, 0
        %340 = vmatprep.subr.mxu0 0.0
        %341 = vmatpush1.msra.mxu0 %v331
        %342 = vmatprep.subr.mxu0 0.0
        %343 = vmatpush1.msra.mxu0 %v332
        %344 = vmatprep.subr.mxu0 0.0
        %345 = vmatpush1.msra.mxu0 %v333
        %346 = vmatprep.subr.mxu0 0.0
        %347 = vmatpush1.msra.mxu0 %v334
        %348 = vmatprep.subr.mxu0 0.0
        %349 = vmatpush1.msra.mxu0 0.0
        %350 = vmatprep.subr.mxu0 0.0
        %351 = vmatpush1.msra.mxu0 0.0
        %352 = vmatprep.subr.mxu0 0.0
        %353 = vmatpush1.msra.mxu0 0.0
        %354 = vmatprep.subr.mxu0 0.0
        %355 = vmatpush1.msra.mxu0 0.0
        %356 = vmatprep.subr.mxu0 0.0
        %357 = vmatpush1.msra.mxu0 0.0
        %358 = vmatprep.subr.mxu0 0.0
        %359 = vmatpush1.msra.mxu0 0.0
        %360 = vmatprep.subr.mxu0 0.0
        %361 = vmatpush1.msra.mxu0 0.0
        %362 = vmatprep.subr.mxu0 0.0
        %363 = vmatpush1.msra.mxu0 0.0
        %364 = vmatprep.subr.mxu0 0.0
        %365 = vmatpush1.msra.mxu0 0.0
        %366 = vmatprep.subr.mxu0 0.0
        %367 = vmatpush1.msra.mxu0 0.0
        %368 = vmatprep.subr.mxu0 0.0
        %369 = vmatpush1.msra.mxu0 0.0
        %370 = vmatprep.subr.mxu0 0.0
        %371 = vmatpush1.msra.mxu0 0.0
        %372 = vmatprep.subr.mxu0 0.0
        %373 = vmatpush1.msra.mxu0 0.0
        %374 = vmatprep.subr.mxu0 0.0
        %375 = vmatpush1.msra.mxu0 0.0
        %376 = vmatprep.subr.mxu0 0.0
        %377 = vmatpush1.msra.mxu0 0.0
        %378 = vmatprep.subr.mxu0 0.0
        %379 = vmatpush1.msra.mxu0 0.0
        %380 = vmatprep.subr.mxu0 0.0
        %381 = vmatpush1.msra.mxu0 0.0
        %382 = vmatprep.subr.mxu0 0.0
        %383 = vmatpush1.msra.mxu0 0.0
        %384 = vmatprep.subr.mxu0 0.0
        %385 = vmatpush1.msra.mxu0 0.0
        %386 = vmatprep.subr.mxu0 0.0
        %387 = vmatpush1.msra.mxu0 0.0
        %388 = vmatprep.subr.mxu0 0.0
        %389 = vmatpush1.msra.mxu0 0.0
        %390 = vmatprep.subr.mxu0 0.0
        %391 = vmatpush1.msra.mxu0 0.0
        %392 = vmatprep.subr.mxu0 0.0
        %393 = vmatpush1.msra.mxu0 0.0
        %394 = vmatprep.subr.mxu0 0.0
        %395 = vmatpush1.msra.mxu0 0.0
        %396 = vmatprep.subr.mxu0 0.0
        %397 = vmatpush1.msra.mxu0 0.0
        %398 = vmatprep.subr.mxu0 0.0
        %399 = vmatpush1.msra.mxu0 0.0
        %400 = vmatprep.subr.mxu0 0.0
        %401 = vmatpush1.msra.mxu0 0.0
        %402 = vmatprep.subr.mxu0 0.0
        %403 = vmatpush1.msra.mxu0 0.0
        %404 = vmatprep.mubr.f32.mxu0 0.0
        %405 = vmatmul.mubr.f32.gmra.mrb[0].mxu0 %v338
        %v406 = vpop.f32.mrb[0].mxu0
        %v407 = vadd.f32 0.0, %v406
        %v408 = vpop.f32.mrb[0].mxu0
        %409 = vdwg.mxu0
        %v410 = vlaneseq
        %v411 = vshrl.u32 %v410, 7
        %v412 = vsub.s32 0, %v411
        %v413 = vrot.slane %v335, %v412
        %v414 = vadd.f32 %v407, %v413
        %v416 = vsel %vm336, %v327, 0
        %418 = vmatprep.subr.mxu0 0.0
        %419 = vmatpush1.msra.mxu0 %v331
        %420 = vmatprep.subr.mxu0 0.0
        %421 = vmatpush1.msra.mxu0 %v332
        %422 = vmatprep.subr.mxu0 0.0
        %423 = vmatpush1.msra.mxu0 %v333
        %424 = vmatprep.subr.mxu0 0.0
        %425 = vmatpush1.msra.mxu0 %v334
        %426 = vmatprep.subr.mxu0 0.0
        %427 = vmatpush1.msra.mxu0 0.0
        %428 = vmatprep.subr.mxu0 0.0
        %429 = vmatpush1.msra.mxu0 0.0
        %430 = vmatprep.subr.mxu0 0.0
        %431 = vmatpush1.msra.mxu0 0.0
        %432 = vmatprep.subr.mxu0 0.0
        %433 = vmatpush1.msra.mxu0 0.0
        %434 = vmatprep.subr.mxu0 0.0
        %435 = vmatpush1.msra.mxu0 0.0
        %436 = vmatprep.subr.mxu0 0.0
        %437 = vmatpush1.msra.mxu0 0.0
        %438 = vmatprep.subr.mxu0 0.0
        %439 = vmatpush1.msra.mxu0 0.0
        %440 = vmatprep.subr.mxu0 0.0
        %441 = vmatpush1.msra.mxu0 0.0
        %442 = vmatprep.subr.mxu0 0.0
        %443 = vmatpush1.msra.mxu0 0.0
        %444 = vmatprep.subr.mxu0 0.0
        %445 = vmatpush1.msra.mxu0 0.0
        %446 = vmatprep.subr.mxu0 0.0
        %447 = vmatpush1.msra.mxu0 0.0
        %448 = vmatprep.subr.mxu0 0.0
        %449 = vmatpush1.msra.mxu0 0.0
        %450 = vmatprep.subr.mxu0 0.0
        %451 = vmatpush1.msra.mxu0 0.0
        %452 = vmatprep.subr.mxu0 0.0
        %453 = vmatpush1.msra.mxu0 0.0
        %454 = vmatprep.subr.mxu0 0.0
        %455 = vmatpush1.msra.mxu0 0.0
        %456 = vmatprep.subr.mxu0 0.0
        %457 = vmatpush1.msra.mxu0 0.0
        %458 = vmatprep.subr.mxu0 0.0
        %459 = vmatpush1.msra.mxu0 0.0
        %460 = vmatprep.subr.mxu0 0.0
        %461 = vmatpush1.msra.mxu0 0.0
        %462 = vmatprep.subr.mxu0 0.0
        %463 = vmatpush1.msra.mxu0 0.0
        %464 = vmatprep.subr.mxu0 0.0
        %465 = vmatpush1.msra.mxu0 0.0
        %466 = vmatprep.subr.mxu0 0.0
        %467 = vmatpush1.msra.mxu0 0.0
        %468 = vmatprep.subr.mxu0 0.0
        %469 = vmatpush1.msra.mxu0 0.0
        %470 = vmatprep.subr.mxu0 0.0
        %471 = vmatpush1.msra.mxu0 0.0
        %472 = vmatprep.subr.mxu0 0.0
        %473 = vmatpush1.msra.mxu0 0.0
        %474 = vmatprep.subr.mxu0 0.0
        %475 = vmatpush1.msra.mxu0 0.0
        %476 = vmatprep.subr.mxu0 0.0
        %477 = vmatpush1.msra.mxu0 0.0
        %478 = vmatprep.subr.mxu0 0.0
        %479 = vmatpush1.msra.mxu0 0.0
        %480 = vmatprep.subr.mxu0 0.0
        %481 = vmatpush1.msra.mxu0 0.0
        %482 = vmatprep.mubr.f32.mxu0 0.0
        %483 = vmatmul.mubr.f32.gmra.mrb[0].mxu0 %v416
        %v484 = vpop.f32.mrb[0].mxu0
        %v485 = vadd.f32 0.0, %v484
        %v486 = vpop.f32.mrb[0].mxu0
        %487 = vdwg.mxu0
        %489 = vrot.lane.b32.xlu0 %v407, 96
        %v490 = vpop.permute.xlu0 %489
        %492 = vxpose.xlu0.b32.start [1/16] %v490, 128
        %493 = vxpose.xlu0.b32.cont [2/16] 0.0, 128
        %494 = vxpose.xlu0.b32.cont [3/16] 0.0, 128
        %495 = vxpose.xlu0.b32.cont [4/16] 0.0, 128
        %496 = vxpose.xlu0.b32.cont [5/16] 0.0, 128
        %497 = vxpose.xlu0.b32.cont [6/16] 0.0, 128
        %498 = vxpose.xlu0.b32.cont [7/16] 0.0, 128
        %499 = vxpose.xlu0.b32.cont [8/16] 0.0, 128
        %500 = vxpose.xlu0.b32.cont [9/16] 0.0, 128
        %501 = vxpose.xlu0.b32.cont [10/16] 0.0, 128
        %502 = vxpose.xlu0.b32.cont [11/16] 0.0, 128
        %503 = vxpose.xlu0.b32.cont [12/16] 0.0, 128
        %504 = vxpose.xlu0.b32.cont [13/16] 0.0, 128
        %505 = vxpose.xlu0.b32.cont [14/16] 0.0, 128
        %506 = vxpose.xlu0.b32.cont [15/16] 0.0, 128
        %507 = vxpose.xlu0.b32.end [16/16] 0.0, 128
        %v508 = vpop.trf.xlu0
        %v509 = vpop.trf.xlu0
        %v510 = vpop.trf.xlu0
        %v511 = vpop.trf.xlu0
        %v512 = vpop.trf.xlu0
        %v513 = vpop.trf.xlu0
        %v514 = vpop.trf.xlu0
        %v515 = vpop.trf.xlu0
        %v516 = vpop.trf.xlu0
        %v517 = vpop.trf.xlu0
        %v518 = vpop.trf.xlu0
        %v519 = vpop.trf.xlu0
        %v520 = vpop.trf.xlu0
        %v521 = vpop.trf.xlu0
        %v522 = vpop.trf.xlu0
        %v523 = vpop.trf.xlu0
        %525 = vset.pattern.permute.xlu0 33
        %526 = vperm.xlu0 %525, %v485
        %v527 = vpop.permute.xlu0 %526
        %v529 = vlaneseq
        %v530 = vshrl.u32 %v529, 7
        %v531 = vsub.s32 0, %v530
        %v532 = vrot.slane %v508, %v531
        %v533 = vadd.f32 %v527, %v532
        %535 = vrot.lane.b32.xlu0 %v335, 96
        %v536 = vpop.permute.xlu0 %535
        %s537 = vtos %v536
        %v538 = vstv %s537
        %v540 = vadd.f32 %v533, %v538
        %vm541 = vcmask 31744
        %v542 = vsel %vm541, %v540, -inf
        %543 = vmax.xlane.f32.xlu0 %v542
        %v544 = vpop.xlane.xlu0 %543
        %v545 = vsub.f32 %v540, %v544
        %v546 = vmul.f32 %v545, 1.442695
        %v547 = vpow.pop %v546
        %v548 = vsel %vm541, %v547, 0.0
        %549 = vadd.xlane.f32.xlu0 %v548
        %v550 = vpop.xlane.xlu0 %549
        %v551 = vrcp.pop %v550
        %v552 = vmul.f32 %v547, %v551
        %v554 = vsel %vm541, %v552, 0
        %vm556 = vcmask 1043456
        %v558 = vsel %vm556, %v414, 0
        %560 = vmatprep.subr.mxu0 0.0
        %561 = vmatpush1.msra.mxu0 %v558
        %562 = vmatprep.subr.mxu0 0.0
        %563 = vmatpush1.msra.mxu0 0.0
        %564 = vmatprep.subr.mxu0 0.0
        %565 = vmatpush1.msra.mxu0 0.0
        %566 = vmatprep.subr.mxu0 0.0
        %567 = vmatpush1.msra.mxu0 0.0
        %568 = vmatprep.subr.mxu0 0.0
        %569 = vmatpush1.msra.mxu0 0.0
        %570 = vmatprep.subr.mxu0 0.0
        %571 = vmatpush1.msra.mxu0 0.0
        %572 = vmatprep.subr.mxu0 0.0
        %573 = vmatpush1.msra.mxu0 0.0
        %574 = vmatprep.subr.mxu0 0.0
        %575 = vmatpush1.msra.mxu0 0.0
        %576 = vmatprep.subr.mxu0 0.0
        %577 = vmatpush1.msra.mxu0 0.0
        %578 = vmatprep.subr.mxu0 0.0
        %579 = vmatpush1.msra.mxu0 0.0
        %580 = vmatprep.subr.mxu0 0.0
        %581 = vmatpush1.msra.mxu0 0.0
        %582 = vmatprep.subr.mxu0 0.0
        %583 = vmatpush1.msra.mxu0 0.0
        %584 = vmatprep.subr.mxu0 0.0
        %585 = vmatpush1.msra.mxu0 0.0
        %586 = vmatprep.subr.mxu0 0.0
        %587 = vmatpush1.msra.mxu0 0.0
        %588 = vmatprep.subr.mxu0 0.0
        %589 = vmatpush1.msra.mxu0 0.0
        %590 = vmatprep.subr.mxu0 0.0
        %591 = vmatpush1.msra.mxu0 0.0
        %592 = vmatprep.subr.mxu0 0.0
        %593 = vmatpush1.msra.mxu0 0.0
        %594 = vmatprep.subr.mxu0 0.0
        %595 = vmatpush1.msra.mxu0 0.0
        %596 = vmatprep.subr.mxu0 0.0
        %597 = vmatpush1.msra.mxu0 0.0
        %598 = vmatprep.subr.mxu0 0.0
        %599 = vmatpush1.msra.mxu0 0.0
        %600 = vmatprep.subr.mxu0 0.0
        %601 = vmatpush1.msra.mxu0 0.0
        %602 = vmatprep.subr.mxu0 0.0
        %603 = vmatpush1.msra.mxu0 0.0
        %604 = vmatprep.subr.mxu0 0.0
        %605 = vmatpush1.msra.mxu0 0.0
        %606 = vmatprep.subr.mxu0 0.0
        %607 = vmatpush1.msra.mxu0 0.0
        %608 = vmatprep.subr.mxu0 0.0
        %609 = vmatpush1.msra.mxu0 0.0
        %610 = vmatprep.subr.mxu0 0.0
        %611 = vmatpush1.msra.mxu0 0.0
        %612 = vmatprep.subr.mxu0 0.0
        %613 = vmatpush1.msra.mxu0 0.0
        %614 = vmatprep.subr.mxu0 0.0
        %615 = vmatpush1.msra.mxu0 0.0
        %616 = vmatprep.subr.mxu0 0.0
        %617 = vmatpush1.msra.mxu0 0.0
        %618 = vmatprep.subr.mxu0 0.0
        %619 = vmatpush1.msra.mxu0 0.0
        %620 = vmatprep.subr.mxu0 0.0
        %621 = vmatpush1.msra.mxu0 0.0
        %622 = vmatprep.subr.mxu0 0.0
        %623 = vmatpush1.msra.mxu0 0.0
        %624 = vmatprep.mubr.f32.mxu0 0.0
        %625 = vmatmul.mubr.f32.gmra.mrb[0].mxu0 %v554
        %v626 = vpop.f32.mrb[0].mxu0
        %v627 = vadd.f32 %v327, %v626
        %v628 = vpop.f32.mrb[0].mxu0
        %629 = vdwg.mxu0
        %v631 = vsel %vm336, %v627, 0
        %633 = vmatprep.subr.mxu0 0.0
        %634 = vmatpush1.msra.mxu0 %v331
        %635 = vmatprep.subr.mxu0 0.0
        %636 = vmatpush1.msra.mxu0 %v332
        %637 = vmatprep.subr.mxu0 0.0
        %638 = vmatpush1.msra.mxu0 %v333
        %639 = vmatprep.subr.mxu0 0.0
        %640 = vmatpush1.msra.mxu0 %v334
        %641 = vmatprep.subr.mxu0 0.0
        %642 = vmatpush1.msra.mxu0 0.0
        %643 = vmatprep.subr.mxu0 0.0
        %644 = vmatpush1.msra.mxu0 0.0
        %645 = vmatprep.subr.mxu0 0.0
        %646 = vmatpush1.msra.mxu0 0.0
        %647 = vmatprep.subr.mxu0 0.0
        %648 = vmatpush1.msra.mxu0 0.0
        %649 = vmatprep.subr.mxu0 0.0
        %650 = vmatpush1.msra.mxu0 0.0
        %651 = vmatprep.subr.mxu0 0.0
        %652 = vmatpush1.msra.mxu0 0.0
        %653 = vmatprep.subr.mxu0 0.0
        %654 = vmatpush1.msra.mxu0 0.0
        %655 = vmatprep.subr.mxu0 0.0
        %656 = vmatpush1.msra.mxu0 0.0
        %657 = vmatprep.subr.mxu0 0.0
        %658 = vmatpush1.msra.mxu0 0.0
        %659 = vmatprep.subr.mxu0 0.0
        %660 = vmatpush1.msra.mxu0 0.0
        %661 = vmatprep.subr.mxu0 0.0
        %662 = vmatpush1.msra.mxu0 0.0
        %663 = vmatprep.subr.mxu0 0.0
        %664 = vmatpush1.msra.mxu0 0.0
        %665 = vmatprep.subr.mxu0 0.0
        %666 = vmatpush1.msra.mxu0 0.0
        %667 = vmatprep.subr.mxu0 0.0
        %668 = vmatpush1.msra.mxu0 0.0
        %669 = vmatprep.subr.mxu0 0.0
        %670 = vmatpush1.msra.mxu0 0.0
        %671 = vmatprep.subr.mxu0 0.0
        %672 = vmatpush1.msra.mxu0 0.0
        %673 = vmatprep.subr.mxu0 0.0
        %674 = vmatpush1.msra.mxu0 0.0
        %675 = vmatprep.subr.mxu0 0.0
        %676 = vmatpush1.msra.mxu0 0.0
        %677 = vmatprep.subr.mxu0 0.0
        %678 = vmatpush1.msra.mxu0 0.0
        %679 = vmatprep.subr.mxu0 0.0
        %680 = vmatpush1.msra.mxu0 0.0
        %681 = vmatprep.subr.mxu0 0.0
        %682 = vmatpush1.msra.mxu0 0.0
        %683 = vmatprep.subr.mxu0 0.0
        %684 = vmatpush1.msra.mxu0 0.0
        %685 = vmatprep.subr.mxu0 0.0
        %686 = vmatpush1.msra.mxu0 0.0
        %687 = vmatprep.subr.mxu0 0.0
        %688 = vmatpush1.msra.mxu0 0.0
        %689 = vmatprep.subr.mxu0 0.0
        %690 = vmatpush1.msra.mxu0 0.0
        %691 = vmatprep.subr.mxu0 0.0
        %692 = vmatpush1.msra.mxu0 0.0
        %693 = vmatprep.subr.mxu0 0.0
        %694 = vmatpush1.msra.mxu0 0.0
        %695 = vmatprep.subr.mxu0 0.0
        %696 = vmatpush1.msra.mxu0 0.0
        %697 = vmatprep.mubr.f32.mxu0 0.0
        %698 = vmatmul.mubr.f32.gmra.mrb[0].mxu0 %v631
        %v699 = vpop.f32.mrb[0].mxu0
        %v700 = vadd.f32 0.0, %v699
        %v701 = vpop.f32.mrb[0].mxu0
        %702 = vdwg.mxu0
        %703 = vrot.lane.b32.xlu0 %v485, 1
        %v704 = vpop.permute.xlu0 %703
        %v706 = vadd.f32 %v700, %v704
        %708 = vrot.lane.b32.xlu0 %v413, 2
        %v709 = vpop.permute.xlu0 %708
        %v711 = vadd.f32 %v706, %v709
        %v712 = vxor.u32 %v711, 2147483648
        %v713 = vmul.f32 %v712, 1.442695
        %v714 = vpow.pop %v713
        %v715 = vadd.f32 %v714, 1.0
        %v716 = vrcp.pop %v715
        %v717 = vmul.f32 1.0, %v716
        %719 = vset.pattern.permute.xlu0 35
        %720 = vperm.xlu0 %719, %v717
        %v721 = vpop.permute.xlu0 %720
        %v723 = vmul.f32 %v721, %v627
        %v724 = vsub.f32 1.0, %v717
        %726 = vset.pattern.permute.xlu0 35
        %727 = vperm.xlu0 %726, %v724
        %v728 = vpop.permute.xlu0 %727
        %v730 = vmul.f32 %v728, %v327
        %v731 = vadd.f32 %v723, %v730
        %v732 = vadd.f32 %v731, %v327
        %s733 = scalar_lea.vmem [#allocation5], 32
        %v734 = vld [vmem:[%s733] sm:$0xff]
        %v735 = vld [vmem:[%s733 + $0x8] sm:$0xff]
        %v736 = vld [vmem:[%s733 + $0x10] sm:$0xff]
        %v737 = vld [vmem:[%s733 + $0x18] sm:$0xff]
        %v738 = vld [vmem:[%s4 + $0x1] sm:$0x1]
        %v740 = vsel %vm336, %v732, 0
        %742 = vmatprep.subr.mxu0 0.0
        %743 = vmatpush1.msra.mxu0 %v734
        %744 = vmatprep.subr.mxu0 0.0
        %745 = vmatpush1.msra.mxu0 %v735
        %746 = vmatprep.subr.mxu0 0.0
        %747 = vmatpush1.msra.mxu0 %v736
        %748 = vmatprep.subr.mxu0 0.0
        %749 = vmatpush1.msra.mxu0 %v737
        %750 = vmatprep.subr.mxu0 0.0
        %751 = vmatpush1.msra.mxu0 0.0
        %752 = vmatprep.subr.mxu0 0.0
        %753 = vmatpush1.msra.mxu0 0.0
        %754 = vmatprep.subr.mxu0 0.0
        %755 = vmatpush1.msra.mxu0 0.0
        %756 = vmatprep.subr.mxu0 0.0
        %757 = vmatpush1.msra.mxu0 0.0
        %758 = vmatprep.subr.mxu0 0.0
        %759 = vmatpush1.msra.mxu0 0.0
        %760 = vmatprep.subr.mxu0 0.0
        %761 = vmatpush1.msra.mxu0 0.0
        %762 = vmatprep.subr.mxu0 0.0
        %763 = vmatpush1.msra.mxu0 0.0
        %764 = vmatprep.subr.mxu0 0.0
        %765 = vmatpush1.msra.mxu0 0.0
        %766 = vmatprep.subr.mxu0 0.0
        %767 = vmatpush1.msra.mxu0 0.0
        %768 = vmatprep.subr.mxu0 0.0
        %769 = vmatpush1.msra.mxu0 0.0
        %770 = vmatprep.subr.mxu0 0.0
        %771 = vmatpush1.msra.mxu0 0.0
        %772 = vmatprep.subr.mxu0 0.0
        %773 = vmatpush1.msra.mxu0 0.0
        %774 = vmatprep.subr.mxu0 0.0
        %775 = vmatpush1.msra.mxu0 0.0
        %776 = vmatprep.subr.mxu0 0.0
        %777 = vmatpush1.msra.mxu0 0.0
        %778 = vmatprep.subr.mxu0 0.0
        %779 = vmatpush1.msra.mxu0 0.0
        %780 = vmatprep.subr.mxu0 0.0
        %781 = vmatpush1.msra.mxu0 0.0
        %782 = vmatprep.subr.mxu0 0.0
        %783 = vmatpush1.msra.mxu0 0.0
        %784 = vmatprep.subr.mxu0 0.0
        %785 = vmatpush1.msra.mxu0 0.0
        %786 = vmatprep.subr.mxu0 0.0
        %787 = vmatpush1.msra.mxu0 0.0
        %788 = vmatprep.subr.mxu0 0.0
        %789 = vmatpush1.msra.mxu0 0.0
        %790 = vmatprep.subr.mxu0 0.0
        %791 = vmatpush1.msra.mxu0 0.0
        %792 = vmatprep.subr.mxu0 0.0
        %793 = vmatpush1.msra.mxu0 0.0
        %794 = vmatprep.subr.mxu0 0.0
        %795 = vmatpush1.msra.mxu0 0.0
        %796 = vmatprep.subr.mxu0 0.0
        %797 = vmatpush1.msra.mxu0 0.0
        %798 = vmatprep.subr.mxu0 0.0
        %799 = vmatpush1.msra.mxu0 0.0
        %800 = vmatprep.subr.mxu0 0.0
        %801 = vmatpush1.msra.mxu0 0.0
        %802 = vmatprep.subr.mxu0 0.0
        %803 = vmatpush1.msra.mxu0 0.0
        %804 = vmatprep.subr.mxu0 0.0
        %805 = vmatpush1.msra.mxu0 0.0
        %806 = vmatprep.mubr.f32.mxu0 0.0
        %807 = vmatmul.mubr.f32.gmra.mrb[0].mxu0 %v740
        %v808 = vpop.f32.mrb[0].mxu0
        %v809 = vadd.f32 0.0, %v808
        %v810 = vpop.f32.mrb[0].mxu0
        %811 = vdwg.mxu0
        %v812 = vlaneseq
        %v813 = vshrl.u32 %v812, 7
        %v814 = vsub.s32 0, %v813
        %v815 = vrot.slane %v738, %v814
        %v816 = vadd.f32 %v809, %v815
        %817 = vmatprep.subr.mxu0 0.0
        %818 = vmatpush1.msra.mxu0 %v734
        %819 = vmatprep.subr.mxu0 0.0
        %820 = vmatpush1.msra.mxu0 %v735
        %821 = vmatprep.subr.mxu0 0.0
        %822 = vmatpush1.msra.mxu0 %v736
        %823 = vmatprep.subr.mxu0 0.0
        %824 = vmatpush1.msra.mxu0 %v737
        %825 = vmatprep.subr.mxu0 0.0
        %826 = vmatpush1.msra.mxu0 0.0
        %827 = vmatprep.subr.mxu0 0.0
        %828 = vmatpush1.msra.mxu0 0.0
        %829 = vmatprep.subr.mxu0 0.0
        %830 = vmatpush1.msra.mxu0 0.0
        %831 = vmatprep.subr.mxu0 0.0
        %832 = vmatpush1.msra.mxu0 0.0
        %833 = vmatprep.subr.mxu0 0.0
        %834 = vmatpush1.msra.mxu0 0.0
        %835 = vmatprep.subr.mxu0 0.0
        %836 = vmatpush1.msra.mxu0 0.0
        %837 = vmatprep.subr.mxu0 0.0
        %838 = vmatpush1.msra.mxu0 0.0
        %839 = vmatprep.subr.mxu0 0.0
        %840 = vmatpush1.msra.mxu0 0.0
        %841 = vmatprep.subr.mxu0 0.0
        %842 = vmatpush1.msra.mxu0 0.0
        %843 = vmatprep.subr.mxu0 0.0
        %844 = vmatpush1.msra.mxu0 0.0
        %845 = vmatprep.subr.mxu0 0.0
        %846 = vmatpush1.msra.mxu0 0.0
        %847 = vmatprep.subr.mxu0 0.0
        %848 = vmatpush1.msra.mxu0 0.0
        %849 = vmatprep.subr.mxu0 0.0
        %850 = vmatpush1.msra.mxu0 0.0
        %851 = vmatprep.subr.mxu0 0.0
        %852 = vmatpush1.msra.mxu0 0.0
        %853 = vmatprep.subr.mxu0 0.0
        %854 = vmatpush1.msra.mxu0 0.0
        %855 = vmatprep.subr.mxu0 0.0
        %856 = vmatpush1.msra.mxu0 0.0
        %857 = vmatprep.subr.mxu0 0.0
        %858 = vmatpush1.msra.mxu0 0.0
        %859 = vmatprep.subr.mxu0 0.0
        %860 = vmatpush1.msra.mxu0 0.0
        %861 = vmatprep.subr.mxu0 0.0
        %862 = vmatpush1.msra.mxu0 0.0
        %863 = vmatprep.subr.mxu0 0.0
        %864 = vmatpush1.msra.mxu0 0.0
        %865 = vmatprep.subr.mxu0 0.0
        %866 = vmatpush1.msra.mxu0 0.0
        %867 = vmatprep.subr.mxu0 0.0
        %868 = vmatpush1.msra.mxu0 0.0
        %869 = vmatprep.subr.mxu0 0.0
        %870 = vmatpush1.msra.mxu0 0.0
        %871 = vmatprep.subr.mxu0 0.0
        %872 = vmatpush1.msra.mxu0 0.0
        %873 = vmatprep.subr.mxu0 0.0
        %874 = vmatpush1.msra.mxu0 0.0
        %875 = vmatprep.subr.mxu0 0.0
        %876 = vmatpush1.msra.mxu0 0.0
        %877 = vmatprep.subr.mxu0 0.0
        %878 = vmatpush1.msra.mxu0 0.0
        %879 = vmatprep.subr.mxu0 0.0
        %880 = vmatpush1.msra.mxu0 0.0
        %881 = vmatprep.mubr.f32.mxu0 0.0
        %882 = vmatmul.mubr.f32.gmra.mrb[0].mxu0 %v338
        %v883 = vpop.f32.mrb[0].mxu0
        %v884 = vadd.f32 0.0, %v883
        %v885 = vpop.f32.mrb[0].mxu0
        %886 = vdwg.mxu0
        %888 = vrot.lane.b32.xlu0 %v809, 96
        %v889 = vpop.permute.xlu0 %888
        %891 = vxpose.xlu0.b32.start [1/16] %v889, 128
        %892 = vxpose.xlu0.b32.cont [2/16] 0.0, 128
        %893 = vxpose.xlu0.b32.cont [3/16] 0.0, 128
        %894 = vxpose.xlu0.b32.cont [4/16] 0.0, 128
        %895 = vxpose.xlu0.b32.cont [5/16] 0.0, 128
        %896 = vxpose.xlu0.b32.cont [6/16] 0.0, 128
        %897 = vxpose.xlu0.b32.cont [7/16] 0.0, 128
        %898 = vxpose.xlu0.b32.cont [8/16] 0.0, 128
        %899 = vxpose.xlu0.b32.cont [9/16] 0.0, 128
        %900 = vxpose.xlu0.b32.cont [10/16] 0.0, 128
        %901 = vxpose.xlu0.b32.cont [11/16] 0.0, 128
        %902 = vxpose.xlu0.b32.cont [12/16] 0.0, 128
        %903 = vxpose.xlu0.b32.cont [13/16] 0.0, 128
        %904 = vxpose.xlu0.b32.cont [14/16] 0.0, 128
        %905 = vxpose.xlu0.b32.cont [15/16] 0.0, 128
        %906 = vxpose.xlu0.b32.end [16/16] 0.0, 128
        %v907 = vpop.trf.xlu0
        %v908 = vpop.trf.xlu0
        %v909 = vpop.trf.xlu0
        %v910 = vpop.trf.xlu0
        %v911 = vpop.trf.xlu0
        %v912 = vpop.trf.xlu0
        %v913 = vpop.trf.xlu0
        %v914 = vpop.trf.xlu0
        %v915 = vpop.trf.xlu0
        %v916 = vpop.trf.xlu0
        %v917 = vpop.trf.xlu0
        %v918 = vpop.trf.xlu0
        %v919 = vpop.trf.xlu0
        %v920 = vpop.trf.xlu0
        %v921 = vpop.trf.xlu0
        %v922 = vpop.trf.xlu0
        %924 = vset.pattern.permute.xlu0 33
        %925 = vperm.xlu0 %924, %v884
        %v926 = vpop.permute.xlu0 %925
        %v928 = vlaneseq
        %v929 = vshrl.u32 %v928, 7
        %v930 = vsub.s32 0, %v929
        %v931 = vrot.slane %v907, %v930
        %v932 = vadd.f32 %v926, %v931
        %934 = vrot.lane.b32.xlu0 %v738, 96
        %v935 = vpop.permute.xlu0 %934
        %s936 = vtos %v935
        %v937 = vstv %s936
        %v939 = vadd.f32 %v932, %v937
        %v940 = vlaneseq
        %v941 = vshrl.u32 %v940, 7
        %v942 = vsub.s32 0, %v941
        %v943 = vrot.slane %v329, %v942
        %v944 = vmul.f32 %v939, %v943
        %v945 = vlaneseq
        %v946 = vshrl.u32 %v945, 7
        %v947 = vsub.s32 0, %v946
        %v948 = vrot.slane %v330, %v947
        %v949 = vadd.f32 %v944, %v948
        %vm950 = vcmask 60416
        %v951 = vsel %vm950, %v949, -inf
        %952 = vmax.xlane.f32.xlu0 %v951
        %v953 = vpop.xlane.xlu0 %952
        %v954 = vsub.f32 %v949, %v953
        %v955 = vmul.f32 %v954, 1.442695
        %v956 = vpow.pop %v955
        %v957 = vsel %vm950, %v956, 0.0
        %958 = vadd.xlane.f32.xlu0 %v957
        %v959 = vpop.xlane.xlu0 %958
        %v960 = vrcp.pop %v959
        %v961 = vmul.f32 %v956, %v960
        %vm962 = vcmask 64512
        %v964 = vsel %vm962, %v961, 0
        %966 = vmatprep.subr.mxu0 0.0
        %967 = vmatpush1.msra.mxu0 %v816
        %968 = vmatprep.subr.mxu0 0.0
        %969 = vmatpush1.msra.mxu0 0.0
        %970 = vmatprep.subr.mxu0 0.0
        %971 = vmatpush1.msra.mxu0 0.0
        %972 = vmatprep.subr.mxu0 0.0
        %973 = vmatpush1.msra.mxu0 0.0
        %974 = vmatprep.subr.mxu0 0.0
        %975 = vmatpush1.msra.mxu0 0.0
        %976 = vmatprep.subr.mxu0 0.0
        %977 = vmatpush1.msra.mxu0 0.0
        %978 = vmatprep.subr.mxu0 0.0
        %979 = vmatpush1.msra.mxu0 0.0
        %980 = vmatprep.subr.mxu0 0.0
        %981 = vmatpush1.msra.mxu0 0.0
        %982 = vmatprep.subr.mxu0 0.0
        %983 = vmatpush1.msra.mxu0 0.0
        %984 = vmatprep.subr.mxu0 0.0
        %985 = vmatpush1.msra.mxu0 0.0
        %986 = vmatprep.subr.mxu0 0.0
        %987 = vmatpush1.msra.mxu0 0.0
        %988 = vmatprep.subr.mxu0 0.0
        %989 = vmatpush1.msra.mxu0 0.0
        %990 = vmatprep.subr.mxu0 0.0
        %991 = vmatpush1.msra.mxu0 0.0
        %992 = vmatprep.subr.mxu0 0.0
        %993 = vmatpush1.msra.mxu0 0.0
        %994 = vmatprep.subr.mxu0 0.0
        %995 = vmatpush1.msra.mxu0 0.0
        %996 = vmatprep.subr.mxu0 0.0
        %997 = vmatpush1.msra.mxu0 0.0
        %998 = vmatprep.subr.mxu0 0.0
        %999 = vmatpush1.msra.mxu0 0.0
        %1000 = vmatprep.subr.mxu0 0.0
        %1001 = vmatpush1.msra.mxu0 0.0
        %1002 = vmatprep.subr.mxu0 0.0
        %1003 = vmatpush1.msra.mxu0 0.0
        %1004 = vmatprep.subr.mxu0 0.0
        %1005 = vmatpush1.msra.mxu0 0.0
        %1006 = vmatprep.subr.mxu0 0.0
        %1007 = vmatpush1.msra.mxu0 0.0
        %1008 = vmatprep.subr.mxu0 0.0
        %1009 = vmatpush1.msra.mxu0 0.0
        %1010 = vmatprep.subr.mxu0 0.0
        %1011 = vmatpush1.msra.mxu0 0.0
        %1012 = vmatprep.subr.mxu0 0.0
        %1013 = vmatpush1.msra.mxu0 0.0
        %1014 = vmatprep.subr.mxu0 0.0
        %1015 = vmatpush1.msra.mxu0 0.0
        %1016 = vmatprep.subr.mxu0 0.0
        %1017 = vmatpush1.msra.mxu0 0.0
        %1018 = vmatprep.subr.mxu0 0.0
        %1019 = vmatpush1.msra.mxu0 0.0
        %1020 = vmatprep.subr.mxu0 0.0
        %1021 = vmatpush1.msra.mxu0 0.0
        %1022 = vmatprep.subr.mxu0 0.0
        %1023 = vmatpush1.msra.mxu0 0.0
        %1024 = vmatprep.subr.mxu0 0.0
        %1025 = vmatpush1.msra.mxu0 0.0
        %1026 = vmatprep.subr.mxu0 0.0
        %1027 = vmatpush1.msra.mxu0 0.0
        %1028 = vmatprep.subr.mxu0 0.0
        %1029 = vmatpush1.msra.mxu0 0.0
        %1030 = vmatprep.mubr.f32.mxu0 0.0
        %1031 = vmatmul.mubr.f32.gmra.mrb[0].mxu0 %v964
        %v1032 = vpop.f32.mrb[0].mxu0
        %v1033 = vadd.f32 %v328, %v1032
        %v1034 = vpop.f32.mrb[0].mxu0
        %1035 = vdwg.mxu0
        %v1037 = vsel %vm336, %v1033, 0
        %1039 = vmatprep.subr.mxu0 0.0
        %1040 = vmatpush1.msra.mxu0 %v734
        %1041 = vmatprep.subr.mxu0 0.0
        %1042 = vmatpush1.msra.mxu0 %v735
        %1043 = vmatprep.subr.mxu0 0.0
        %1044 = vmatpush1.msra.mxu0 %v736
        %1045 = vmatprep.subr.mxu0 0.0
        %1046 = vmatpush1.msra.mxu0 %v737
        %1047 = vmatprep.subr.mxu0 0.0
        %1048 = vmatpush1.msra.mxu0 0.0
        %1049 = vmatprep.subr.mxu0 0.0
        %1050 = vmatpush1.msra.mxu0 0.0
        %1051 = vmatprep.subr.mxu0 0.0
        %1052 = vmatpush1.msra.mxu0 0.0
        %1053 = vmatprep.subr.mxu0 0.0
        %1054 = vmatpush1.msra.mxu0 0.0
        %1055 = vmatprep.subr.mxu0 0.0
        %1056 = vmatpush1.msra.mxu0 0.0
        %1057 = vmatprep.subr.mxu0 0.0
        %1058 = vmatpush1.msra.mxu0 0.0
        %1059 = vmatprep.subr.mxu0 0.0
        %1060 = vmatpush1.msra.mxu0 0.0
        %1061 = vmatprep.subr.mxu0 0.0
        %1062 = vmatpush1.msra.mxu0 0.0
        %1063 = vmatprep.subr.mxu0 0.0
        %1064 = vmatpush1.msra.mxu0 0.0
        %1065 = vmatprep.subr.mxu0 0.0
        %1066 = vmatpush1.msra.mxu0 0.0
        %1067 = vmatprep.subr.mxu0 0.0
        %1068 = vmatpush1.msra.mxu0 0.0
        %1069 = vmatprep.subr.mxu0 0.0
        %1070 = vmatpush1.msra.mxu0 0.0
        %1071 = vmatprep.subr.mxu0 0.0
        %1072 = vmatpush1.msra.mxu0 0.0
        %1073 = vmatprep.subr.mxu0 0.0
        %1074 = vmatpush1.msra.mxu0 0.0
        %1075 = vmatprep.subr.mxu0 0.0
        %1076 = vmatpush1.msra.mxu0 0.0
        %1077 = vmatprep.subr.mxu0 0.0
        %1078 = vmatpush1.msra.mxu0 0.0
        %1079 = vmatprep.subr.mxu0 0.0
        %1080 = vmatpush1.msra.mxu0 0.0
        %1081 = vmatprep.subr.mxu0 0.0
        %1082 = vmatpush1.msra.mxu0 0.0
        %1083 = vmatprep.subr.mxu0 0.0
        %1084 = vmatpush1.msra.mxu0 0.0
        %1085 = vmatprep.subr.mxu0 0.0
        %1086 = vmatpush1.msra.mxu0 0.0
        %1087 = vmatprep.subr.mxu0 0.0
        %1088 = vmatpush1.msra.mxu0 0.0
        %1089 = vmatprep.subr.mxu0 0.0
        %1090 = vmatpush1.msra.mxu0 0.0
        %1091 = vmatprep.subr.mxu0 0.0
        %1092 = vmatpush1.msra.mxu0 0.0
        %1093 = vmatprep.subr.mxu0 0.0
        %1094 = vmatpush1.msra.mxu0 0.0
        %1095 = vmatprep.subr.mxu0 0.0
        %1096 = vmatpush1.msra.mxu0 0.0
        %1097 = vmatprep.subr.mxu0 0.0
        %1098 = vmatpush1.msra.mxu0 0.0
        %1099 = vmatprep.subr.mxu0 0.0
        %1100 = vmatpush1.msra.mxu0 0.0
        %1101 = vmatprep.subr.mxu0 0.0
        %1102 = vmatpush1.msra.mxu0 0.0
        %1103 = vmatprep.mubr.f32.mxu0 0.0
        %1104 = vmatmul.mubr.f32.gmra.mrb[0].mxu0 %v1037
        %v1105 = vpop.f32.mrb[0].mxu0
        %v1106 = vadd.f32 0.0, %v1105
        %v1107 = vpop.f32.mrb[0].mxu0
        %1108 = vdwg.mxu0
        %1109 = vrot.lane.b32.xlu0 %v884, 1
        %v1110 = vpop.permute.xlu0 %1109
        %v1112 = vadd.f32 %v1106, %v1110
        %1114 = vrot.lane.b32.xlu0 %v815, 2
        %v1115 = vpop.permute.xlu0 %1114
        %v1117 = vadd.f32 %v1112, %v1115
        %v1118 = vxor.u32 %v1117, 2147483648
        %v1119 = vmul.f32 %v1118, 1.442695
        %v1120 = vpow.pop %v1119
        %v1121 = vadd.f32 %v1120, 1.0
        %v1122 = vrcp.pop %v1121
        %v1123 = vmul.f32 1.0, %v1122
        %1125 = vset.pattern.permute.xlu0 35
        %1126 = vperm.xlu0 %1125, %v1123
        %v1127 = vpop.permute.xlu0 %1126
        %v1129 = vmul.f32 %v1127, %v1033
        %v1130 = vsub.f32 1.0, %v1123
        %1132 = vset.pattern.permute.xlu0 35
        %1133 = vperm.xlu0 %1132, %v1130
        %v1134 = vpop.permute.xlu0 %1133
        %v1136 = vmul.f32 %v1134, %v328
        %v1137 = vadd.f32 %v1129, %v1136
        %v1138 = vadd.f32 %v1137, %v328
        %1139 = vst.msk [vmem:[%s311] sm:$0xff] %vm336, %v732
        %vm1140 = vcmask 257024
        %1141 = vst.msk [vmem:[%s318] sm:$0xf] %vm1140, %v1138
        %s1142 = sand.u32 %s156, 1
        %s1143 = scalar_lea.sflag [#allocation4], %s1142
        %s1144 = sand.u32 %s156, 1
        %s1145 = smul.addr %s1144, 8
        %s1146 = scalar_lea.vmem [#allocation7], %s1145
        %s1147 = sand.u32 %s182, 1
        %s1148 = scalar_lea.sflag [#allocation9], %s1147
        %s1149 = sand.u32 %s182, 1
        %s1150 = smul.addr %s1149, 4
        %s1151 = scalar_lea.vmem [#allocation8], %s1150
        // Predicated region
        $region49: #{gat_layer.1} parent=39 // pred_check
          %p1152 = pneg %p166
        $region50: #{gat_layer.1} parent=39 // pred_check_branch
          %1154 = sbr.rel (%p1152) target = $region52
        $region51: #{gat_layer.1} parent=39 // pred_region
          %s1156 = ssub.s32 128, 128
          %1157 = vsyncadd %s1143, %s1156
          %s1158 = smul.addr %s28, 128
          %s1159 = scalar_lea.hbm %s5, %s1158
          %s1161 = sshll.u32 %s1146, 4
          %s1162 = int_to_ptr.vmem [resolvable:$true] %s1161
          %1164 = dma.vmem_to_hbm [thread:$0]  %s1162, 128, %s1159, %s1143
        $region52: #{gat_layer.1} parent=39 // pred_fallthru
          _
        // Predicated region
        $region53: #{gat_layer.1} parent=39 // pred_check
          %p1165 = pneg %p192
        $region54: #{gat_layer.1} parent=39 // pred_check_branch
          %1167 = sbr.rel (%p1165) target = $region56
        $region55: #{gat_layer.1} parent=39 // pred_region
          %s1169 = ssub.s32 64, 64
          %1170 = vsyncadd %s1148, %s1169
          %s1171 = smul.addr %s28, 64
          %s1172 = scalar_lea.hbm %s6, %s1171
          %s1174 = sshll.u32 %s1151, 4
          %s1175 = int_to_ptr.vmem [resolvable:$true] %s1174
          %1177 = dma.vmem_to_hbm [thread:$0]  %s1175, 64, %s1172, %s1148
        $region56: #{gat_layer.1} parent=39 // pred_fallthru
          _
      $region40: #{gat_layer.1} parent=5 // pred_fallthru
        _
      %p1178 = scmp.le.s32.totalorder 2, %s23
      // Predicated region
      $region57: #{gat_layer.1} parent=5 // pred_check
        %p1179 = pneg %p1178
      $region58: #{gat_layer.1} parent=5 // pred_check_branch
        %1181 = sbr.rel (%p1179) target = $region60
      $region59: #{gat_layer.1} parent=5 // pred_region
        %s1182 = ssub.s32 %s23, 2
        // Predicated region
        $region61: #{gat_layer.1} parent=59 // pred_check
          %p1183 = pneg %p172
        $region62: #{gat_layer.1} parent=59 // pred_check_branch
          %1185 = sbr.rel (%p1183) target = $region64
        $region63: #{gat_layer.1} parent=59 // pred_region
          %s1186 = sand.u32 %s157, 1
          %s1187 = scalar_lea.sflag [#allocation4], %s1186
          %s1188 = sand.u32 %s157, 1
          %s1189 = smul.addr %s1188, 8
          %s1190 = scalar_lea.vmem [#allocation7], %s1189
          %1191 = dma.done %s1187, 128
        $region64: #{gat_layer.1} parent=59 // pred_fallthru
          _
        // Predicated region
        $region65: #{gat_layer.1} parent=59 // pred_check
          %p1192 = pneg %p198
        $region66: #{gat_layer.1} parent=59 // pred_check_branch
          %1194 = sbr.rel (%p1192) target = $region68
        $region67: #{gat_layer.1} parent=59 // pred_region
          %s1195 = sand.u32 %s183, 1
          %s1196 = scalar_lea.sflag [#allocation9], %s1195
          %s1197 = sand.u32 %s183, 1
          %s1198 = smul.addr %s1197, 4
          %s1199 = scalar_lea.vmem [#allocation8], %s1198
          %1200 = dma.done %s1196, 64
        $region68: #{gat_layer.1} parent=59 // pred_fallthru
          _
      $region60: #{gat_layer.1} parent=5 // pred_fallthru
        _
    $region6: #{gat_layer.1} parent=1 // loop_footer
      %s27 = sadd.s32 1, %s23
    $region7: #{gat_layer.1} parent=1 // loop_footer_branch
      %22 = sbr.rel target = $region3
    $region8: #{gat_layer.1} parent=1 // loop_exit
      _
    %1201 = vsyncpa [#allocation3], 1
    %s1202 = scalar_lea.sflag [#allocation3], 1
    %1203 = vsyncpa %s1202, 1
    %1204 = vsyncpa [#allocation6], 1
    %1205 = vsyncpa [#allocation4], 1
    %s1206 = scalar_lea.sflag [#allocation4], 1
    %1207 = vsyncpa %s1206, 1
    %1208 = vsyncpa [#allocation9], 1
    %s1209 = scalar_lea.sflag [#allocation9], 1
    %1210 = vsyncpa %s1209, 1

</llo_original>
